<compile_context>
chip_gen: v6e
topology: v6e:2x2x1
jax: 0.10.0
libtpu: 0.0.40
codegen_flags: <defaults>
</compile_context>

<pallas_src>
import math

import jax
import jax.numpy as jnp
import numpy as np
from jax.experimental import pallas as pl
from jax.experimental.pallas import tpu as pltpu

# ---- module constants (Pendulum2_L.__init_dynamic_variable) ------------------
OBJ = 2
DIM = 1
DOF = OBJ * DIM            # = 2
M1, M2 = 1.0, 1.0          # self.m
L1, L2 = 1.0, 1.0          # self.l
G = 9.8                    # self.g
TWO_PI = 2.0 * math.pi
LANE = 128

# folded scalar constants
C11 = (M1 + M2) * L1 * L1      # dvdvL[0,0]
C22 = M2 * L2 * L2             # dvdvL[1,1]
K12 = M2 * L1 * L2             # coefficient of cos/sin(th1-th2) terms
GC1 = (M1 + M2) * G * L1       # gravity torque coefficient, link 1
GC2 = M2 * G * L2              # gravity torque coefficient, link 2


def _pend2_kernel(coords_ref, acc_ref):
    # coords_ref block: (4, block_rows, 128), rows = [th1, th2, v1, v2],
    # batch lane-dense along the last axis. acc_ref block: (2, block_rows, 128).
    th1 = coords_ref[0]
    th2 = coords_ref[1]
    v1 = coords_ref[2]
    v2 = coords_ref[3]

    # torch applies `x % (2*pi)` before sin/cos; sin/cos are 2*pi-periodic so the
    # mod is dropped (identical outputs, fewer VPU ops).
    s1 = jnp.sin(th1)
    s2 = jnp.sin(th2)
    d12 = th1 - th2
    c12 = jnp.cos(d12)
    s12 = jnp.sin(d12)

    m12 = K12 * c12                      # off-diagonal of the mass matrix dvdvL
    k = K12 * s12
    kvv = k * v1 * v2

    # dxL (gradient of L wrt angles), closed form
    dxL1 = -kvv - GC1 * s1
    dxL2 = kvv - GC2 * s2

    # dxdvL @ v, closed form
    dv = v2 - v1
    rhs1 = dxL1 - k * v2 * dv
    rhs2 = dxL2 - k * v1 * dv

    # a = dvdvL^{-1} @ rhs  (2x2 adjugate solve; det in [1, 2] -> well conditioned).
    # EUP approximate reciprocal + one Newton step (~2^-24 rel err) keeps the heavy
    # part off the VALU slots (binding unit on v7x).
    det = C11 * C22 - m12 * m12
    r0 = pl.reciprocal(det, approx=True)
    inv_det = r0 * (2.0 - det * r0)

    acc_ref[0] = (C22 * rhs1 - m12 * rhs2) * inv_det
    acc_ref[1] = (C11 * rhs2 - m12 * rhs1) * inv_det


def _choose_block_rows(n_rows, requested):
    """Pick a sublane-aligned block height.

    Targets >= 4 grid steps whenever the batch permits (v7x megacore + DMA
    pipelining; bounds padding waste to < one block) and caps at 1024 rows
    (~6 MiB double-buffered footprint, safe on v5e's 16 MiB scoped-VMEM default).
    """
    cap = 1024
    req = max(8, min(int(requested), cap))
    req = (req // 8) * 8
    by_steps = -(-n_rows // 4)                 # cdiv(n_rows, target_steps=4)
    by_steps = -(-by_steps // 8) * 8           # sublane (8) alignment
    return max(8, min(req, by_steps))


def _pend2_accel(coords_t, block_rows):
    """State-major core: coords_t (4, n_rows, 128) -> accelerations (2, n_rows, 128)."""
    _, n_rows_pad, _ = coords_t.shape
    return pl.pallas_call(
        _pend2_kernel,
        out_shape=jax.ShapeDtypeStruct((DOF, n_rows_pad, LANE), jnp.float32),
        grid=(n_rows_pad // block_rows,),
        in_specs=[pl.BlockSpec((2 * DOF, block_rows, LANE), lambda i: (0, i, 0))],
        out_specs=pl.BlockSpec((DOF, block_rows, LANE), lambda i: (0, i, 0)),
        compiler_params=pltpu.CompilerParams(dimension_semantics=("parallel",)),
    )(coords_t)


def pendulum2_forward(t, coords, block_rows=512):
    """JAX/Pallas equivalent of Pendulum2_L.forward(t, coords)."""
    del t  # t is unused in the torch forward as well
    coords = jnp.asarray(coords, jnp.float32)
    bs = coords.shape[0]

    n_rows = -(-bs // LANE)                         # batch rows of 128 lanes
    br = _choose_block_rows(n_rows, block_rows)
    n_rows_pad = -(-n_rows // br) * br
    bs_pad = n_rows_pad * LANE

    padded = coords
    if bs_pad != bs:
        # zero pad is NaN-safe: det == 1 on padded rows
        padded = jnp.pad(coords, ((0, bs_pad - bs), (0, 0)))

    # state-major, lane-dense layout: (4, n_rows_pad, 128).
    # (Kept wrapper-side: a 4-wide lane dim inside VMEM would pad to 128 lanes.)
    coords_t = padded.T.reshape(2 * DOF, n_rows_pad, LANE)

    acc_t = _pend2_accel(coords_t, br)              # (2, n_rows_pad, 128)

    a = acc_t.reshape(DOF, bs_pad).T[:bs]           # (bs, 2)
    # v is passed through unchanged from the input (not streamed via the kernel).
    return jnp.concatenate([coords[:, DOF:], a], axis=1)   # == torch.cat([v, a], 1)


# ---- pure-JAX reference (mirrors the torch autograd path) ---------------------
_M = (M1, M2)
_L = (L1, L2)


def _lagrangian_single(xv):
    x, v = xv[:DOF], xv[DOF:]
    T = 0.0
    vx = 0.0
    vy = 0.0
    for i in range(DOF):
        vx = vx + _L[i] * v[i] * jnp.cos(x[i])
        vy = vy + _L[i] * v[i] * jnp.sin(x[i])
        T = T + 0.5 * _M[i] * (vx ** 2 + vy ** 2)
    U = 0.0
    y = 0.0
    for i in range(OBJ):
        y = y - _L[i] * jnp.cos(x[i])
        U = U + _M[i] * G * y
    return T - U


def _reference_forward(coords):
    x = jnp.mod(coords[:, :DOF], TWO_PI)
    v = coords[:, DOF:]
    xv = jnp.concatenate([x, v], axis=-1)

    def single(s):
        g = jax.grad(_lagrangian_single)(s)
        H = jax.jacfwd(jax.grad(_lagrangian_single))(s)
        dxL = g[:DOF]
        dvdvL = H[DOF:, DOF:]
        dxdvL = H[DOF:, :DOF]
        vv = s[DOF:]
        a = jnp.linalg.solve(dvdvL, dxL - dxdvL @ vv)
        return jnp.concatenate([vv, a])

    return jax.vmap(single)(xv)


def _make_coords(key, bs):
    k_th, k_p = jax.random.split(key)
    thetas = jax.random.uniform(k_th, (bs, DOF), jnp.float32, -2.0 * TWO_PI, 2.0 * TWO_PI)
    moms = jax.random.uniform(k_p, (bs, DOF), jnp.float32, -2.0, 2.0)
    return jnp.concatenate([thetas, moms], axis=-1)


if __name__ == "__main__":
    t = jnp.float32(0.0)

    # Small primary test (bs=8): single 8-row block, padded to 1024 batch lanes.
    coords = _make_coords(jax.random.PRNGKey(0), 8)
    out = jax.block_until_ready(pendulum2_forward(t, coords))
    ref = jax.block_until_ready(_reference_forward(coords))
    assert out.shape == (8, 2 * DOF)
    np.testing.assert_allclose(np.asarray(out), np.asarray(ref), rtol=1e-4, atol=1e-4)

    # Secondary test: exercises the block-size chooser, the gridded/pipelined path
    # (grid=(3,)) and non-multiple-of-128 batch padding.
    coords2 = _make_coords(jax.random.PRNGKey(1), 2053)
    out2 = jax.block_until_ready(pendulum2_forward(t, coords2))
    ref2 = jax.block_until_ready(_reference_forward(coords2))
    assert out2.shape == (2053, 2 * DOF)
    np.testing.assert_allclose(np.asarray(out2), np.asarray(ref2), rtol=1e-4, atol=1e-4)

    print("KERNEL_OK")
</pallas_src>

<mosaic_0001>
module attributes {stable_mosaic.version = 11 : i64} {
  func.func @_pend2_kernel(%arg0: i32, %arg1: memref<4x8x128xf32, #tpu.memory_space<vmem>>, %arg2: memref<2x8x128xf32, #tpu.memory_space<vmem>>) attributes {dimension_semantics = [#tpu.dimension_semantics<parallel>], iteration_bounds = array<i64: 1>, scalar_prefetch = 0 : i64, scratch_operands = 0 : i64, tpu.core_type = #tpu.core_type<tc>, window_params = [{transform_indices = @transform_0, window_bounds = array<i64: 4, 8, 128>}, {transform_indices = @transform_1, window_bounds = array<i64: 2, 8, 128>}]} {
    %c0 = arith.constant 0 : index
    %c0_0 = arith.constant 0 : index
    %c0_1 = arith.constant 0 : index
    %0 = vector.load %arg1[%c0, %c0_0, %c0_1] : memref<4x8x128xf32, #tpu.memory_space<vmem>>, vector<1x8x128xf32>
    %1 = vector.shape_cast %0 : vector<1x8x128xf32> to vector<8x128xf32>
    %c1 = arith.constant 1 : index
    %c0_2 = arith.constant 0 : index
    %c0_3 = arith.constant 0 : index
    %2 = vector.load %arg1[%c1, %c0_2, %c0_3] : memref<4x8x128xf32, #tpu.memory_space<vmem>>, vector<1x8x128xf32>
    %3 = vector.shape_cast %2 : vector<1x8x128xf32> to vector<8x128xf32>
    %c2 = arith.constant 2 : index
    %c0_4 = arith.constant 0 : index
    %c0_5 = arith.constant 0 : index
    %4 = vector.load %arg1[%c2, %c0_4, %c0_5] : memref<4x8x128xf32, #tpu.memory_space<vmem>>, vector<1x8x128xf32>
    %5 = vector.shape_cast %4 : vector<1x8x128xf32> to vector<8x128xf32>
    %c3 = arith.constant 3 : index
    %c0_6 = arith.constant 0 : index
    %c0_7 = arith.constant 0 : index
    %6 = vector.load %arg1[%c3, %c0_6, %c0_7] : memref<4x8x128xf32, #tpu.memory_space<vmem>>, vector<1x8x128xf32>
    %7 = vector.shape_cast %6 : vector<1x8x128xf32> to vector<8x128xf32>
    %8 = math.sin %1 : vector<8x128xf32>
    %9 = math.sin %3 : vector<8x128xf32>
    %10 = arith.subf %1, %3 : vector<8x128xf32>
    %11 = math.cos %10 : vector<8x128xf32>
    %12 = math.sin %10 : vector<8x128xf32>
    %cst = arith.constant 1.000000e+00 : f32
    %13 = vector.broadcast %cst : f32 to vector<8x128xf32>
    %14 = arith.mulf %13, %11 : vector<8x128xf32>
    %cst_8 = arith.constant 1.000000e+00 : f32
    %15 = vector.broadcast %cst_8 : f32 to vector<8x128xf32>
    %16 = arith.mulf %15, %12 : vector<8x128xf32>
    %17 = arith.mulf %16, %5 : vector<8x128xf32>
    %18 = arith.mulf %17, %7 : vector<8x128xf32>
    %cst_9 = arith.constant 0.000000e+00 : f32
    %19 = vector.broadcast %cst_9 : f32 to vector<8x128xf32>
    %20 = arith.subf %19, %18 : vector<8x128xf32>
    %cst_10 = arith.constant 1.960000e+01 : f32
    %21 = vector.broadcast %cst_10 : f32 to vector<8x128xf32>
    %22 = arith.mulf %21, %8 : vector<8x128xf32>
    %23 = arith.subf %20, %22 : vector<8x128xf32>
    %cst_11 = arith.constant 9.800000e+00 : f32
    %24 = vector.broadcast %cst_11 : f32 to vector<8x128xf32>
    %25 = arith.mulf %24, %9 : vector<8x128xf32>
    %26 = arith.subf %18, %25 : vector<8x128xf32>
    %27 = arith.subf %7, %5 : vector<8x128xf32>
    %28 = arith.mulf %16, %7 : vector<8x128xf32>
    %29 = arith.mulf %28, %27 : vector<8x128xf32>
    %30 = arith.subf %23, %29 : vector<8x128xf32>
    %31 = arith.mulf %16, %5 : vector<8x128xf32>
    %32 = arith.mulf %31, %27 : vector<8x128xf32>
    %33 = arith.subf %26, %32 : vector<8x128xf32>
    %34 = arith.mulf %14, %14 : vector<8x128xf32>
    %cst_12 = arith.constant 2.000000e+00 : f32
    %35 = vector.broadcast %cst_12 : f32 to vector<8x128xf32>
    %36 = arith.subf %35, %34 : vector<8x128xf32>
    %37 = tpu.reciprocal %36 {approx = true} : vector<8x128xf32> -> vector<8x128xf32>
    %38 = arith.mulf %36, %37 : vector<8x128xf32>
    %cst_13 = arith.constant 2.000000e+00 : f32
    %39 = vector.broadcast %cst_13 : f32 to vector<8x128xf32>
    %40 = arith.subf %39, %38 : vector<8x128xf32>
    %41 = arith.mulf %37, %40 : vector<8x128xf32>
    %cst_14 = arith.constant 1.000000e+00 : f32
    %42 = vector.broadcast %cst_14 : f32 to vector<8x128xf32>
    %43 = arith.mulf %42, %30 : vector<8x128xf32>
    %44 = arith.mulf %14, %33 : vector<8x128xf32>
    %45 = arith.subf %43, %44 : vector<8x128xf32>
    %46 = arith.mulf %45, %41 : vector<8x128xf32>
    %c0_15 = arith.constant 0 : index
    %c0_16 = arith.constant 0 : index
    %c0_17 = arith.constant 0 : index
    %47 = vector.load %arg2[%c0_15, %c0_16, %c0_17] : memref<2x8x128xf32, #tpu.memory_space<vmem>>, vector<1x8x128xf32>
    %48 = vector.shape_cast %47 : vector<1x8x128xf32> to vector<8x128xf32>
    %49 = vector.shape_cast %46 : vector<8x128xf32> to vector<1x8x128xf32>
    tpu.vector_store %arg2[%c0_15, %c0_16, %c0_17], %49 {strides = array<i32>} : memref<2x8x128xf32, #tpu.memory_space<vmem>>, vector<1x8x128xf32>,
    %cst_18 = arith.constant 2.000000e+00 : f32
    %50 = vector.broadcast %cst_18 : f32 to vector<8x128xf32>
    %51 = arith.mulf %50, %33 : vector<8x128xf32>
    %52 = arith.mulf %14, %30 : vector<8x128xf32>
    %53 = arith.subf %51, %52 : vector<8x128xf32>
    %54 = arith.mulf %53, %41 : vector<8x128xf32>
    %c1_19 = arith.constant 1 : index
    %c0_20 = arith.constant 0 : index
    %c0_21 = arith.constant 0 : index
    %55 = vector.load %arg2[%c1_19, %c0_20, %c0_21] : memref<2x8x128xf32, #tpu.memory_space<vmem>>, vector<1x8x128xf32>
    %56 = vector.shape_cast %55 : vector<1x8x128xf32> to vector<8x128xf32>
    %57 = vector.shape_cast %54 : vector<8x128xf32> to vector<1x8x128xf32>
    tpu.vector_store %arg2[%c1_19, %c0_20, %c0_21], %57 {strides = array<i32>} : memref<2x8x128xf32, #tpu.memory_space<vmem>>, vector<1x8x128xf32>,
    return
  }
  func.func @transform_0(%arg0: i32) -> (i32, i32, i32) {
    %c0_i32 = arith.constant 0 : i32
    %c0_i32_0 = arith.constant 0 : i32
    %c0_i32_1 = arith.constant 0 : i32
    return %c0_i32, %arg0, %c0_i32_0 : i32, i32, i32
  }
  func.func @transform_1(%arg0: i32) -> (i32, i32, i32) {
    %c0_i32 = arith.constant 0 : i32
    %c0_i32_0 = arith.constant 0 : i32
    %c0_i32_1 = arith.constant 0 : i32
    return %c0_i32, %arg0, %c0_i32_0 : i32, i32, i32
  }
}

</mosaic_0001>

<llo_original>
// kernel: tpu_custom_call.1
$region0: #{tpu_custom_call.1}
  #allocation0 [shape = 'u32[]', space=smem, size = 0x4, offset = 0x4, fixed_abs, tag = 'smem constant byte address 0x4 - core index']
  #allocation1 [shape = 'u32[144,128]{1,0:T(1,128)}', space=vmem, size = 0x12000, scoped, tag = 'internal scratch']
  %s0 = inlined_call_operand.hbm [shape: f32[4,8,128], index: 0, kind: input, shape index: {}]
  %s1 = inlined_call_operand.hbm [shape: f32[2,8,128], index: 1, kind: output, shape index: {}]
  %s2 = sld [smem:[#allocation0]]
  $region18: #{tpu_custom_call.1} parent=0
    _
  %s4 = ssub.s32 1, %s2
  %s5 = scalar_select 0, %s4, %s2
  $region1: #{tpu_custom_call.1} parent=0
    #allocation2 [shape = 'u8[16384]{0}', space=vmem, size = 0x4000, scoped, tag = 'input window, operand 0, single buffered']
    #allocation3 [shape = 's32[1]{0}', space=sflag, size = 0x4, scoped, tag = 'scoped memory for tpu_custom_call.1']
    #allocation4 [shape = 's32[1]{0}', space=sflag, size = 0x4, scoped, tag = 'scoped memory for tpu_custom_call.1']
    #allocation5 [shape = 'u8[8192]{0}', space=vmem, size = 0x2000, scoped, tag = 'output window, operand 0, single buffered']
    %6 = vsyncpa [#allocation3], 0
    %7 = vsyncpa [#allocation4], 0
    // Predicated region
    $region2: #{tpu_custom_call.1} parent=1 // pred_check
      _
    $region3: #{tpu_custom_call.1} parent=1 // pred_check_branch
      %9 = sbr.rel (0) target = $region5
    $region4: #{tpu_custom_call.1} parent=1 // pred_region
      %s11 = ssub.s32 512, 512
      %12 = vsyncadd [#allocation3], %s11
      %s13 = sshll.u32 [#allocation2], 4
      %s14 = int_to_ptr.vmem [resolvable:$true] %s13
      %19 = dma.hbm_to_vmem [thread:$0]  %s0, 512, %s14, [#allocation3], 128, 128, 8
    $region5: #{tpu_custom_call.1} parent=1 // pred_fallthru
      _
    // Predicated region
    $region6: #{tpu_custom_call.1} parent=1 // pred_check
      _
    $region7: #{tpu_custom_call.1} parent=1 // pred_check_branch
      %21 = sbr.rel (0) target = $region9
    $region8: #{tpu_custom_call.1} parent=1 // pred_region
      %22 = dma.done [#allocation3], 512
    $region9: #{tpu_custom_call.1} parent=1 // pred_fallthru
      _
    %v23 = vld [vmem:[#allocation2] sm:$0xff]
    %s24 = scalar_lea.vmem [#allocation2], 8
    %v25 = vld [vmem:[%s24] sm:$0xff]
    %s26 = scalar_lea.vmem [#allocation2], 16
    %v27 = vld [vmem:[%s26] sm:$0xff]
    %s28 = scalar_lea.vmem [#allocation2], 24
    %v29 = vld [vmem:[%s28] sm:$0xff]
    %v30 = vand.u32 2147483647, %v23
    %vm31 = vcmp.le.f32.partialorder %v30, 0.7853982
    %vm32 = vcmp.lt.s32.totalorder %v23, 0
    %v33 = vand.u32 %v23, 2139095040
    %v34 = vshrl.u32 %v33, 23
    %v35 = vsub.s32 %v34, 127
    %v36 = vand.u32 2147483647, %v23
    %v37 = vand.u32 %v36, 8388607
    %v38 = vor.u32 %v37, 8388608
    %v39 = vsub.s32 0, %v38
    %v40 = vadd.s32 %v35, 1
    %vm41 = vcmp.gt.s32.totalorder %v40, 0
    %v42 = vsel %vm41, %v40, 0
    %v43 = vshrl.u32 %v42, 5
    %v44 = vand.u32 %v42, 31
    %v45 = vsub.s32 32, %v44
    %v46 = vshrl.u32 683565275, %v45
    %v47 = vshll.u32 683565275, %v44
    %v48 = vshrl.u32 2475754826, %v45
    %v49 = vor.u32 %v47, %v48
    %v50 = vshll.u32 2475754826, %v44
    %v51 = vshrl.u32 2131351028, %v45
    %v52 = vor.u32 %v50, %v51
    %v53 = vshll.u32 2131351028, %v44
    %v54 = vshrl.u32 2102212464, %v45
    %v55 = vor.u32 %v53, %v54
    %v56 = vshll.u32 2102212464, %v44
    %v57 = vshrl.u32 920167782, %v45
    %v58 = vor.u32 %v56, %v57
    %v59 = vshll.u32 920167782, %v44
    %v60 = vshrl.u32 1326507024, %v45
    %v61 = vor.u32 %v59, %v60
    %vm62 = vcmp.lt.s32.totalorder %v43, 1
    %vm63 = vcmp.lt.s32.totalorder %v43, 2
    %vm64 = vcmp.lt.s32.totalorder %v43, 3
    %vm65 = vcmp.lt.s32.totalorder %v43, 4
    %v66 = vsel %vm62, %v46, %v49
    %v67 = vsel %vm65, %v55, 2102212464
    %v68 = vsel %vm64, %v52, %v67
    %v69 = vsel %vm63, %v66, %v68
    %v70 = vsel %vm62, %v49, %v52
    %v71 = vsel %vm65, %v58, 920167782
    %v72 = vsel %vm64, %v55, %v71
    %v73 = vsel %vm63, %v70, %v72
    %v74 = vsel %vm62, %v52, %v55
    %v75 = vsel %vm65, %v61, 1326507024
    %v76 = vsel %vm64, %v58, %v75
    %v77 = vsel %vm63, %v74, %v76
    %v78 = vshll.u32 %v38, 8
    %v79 = vmul.u32.u64.compose %v78, %v77
    %v80 = vextract.low.u32 %v79
    %v81 = vextract.high.u32 %v79
    %v82 = vmul.u32.u64.compose %v78, %v73
    %v83 = vextract.low.u32 %v82
    %v84 = vextract.high.u32 %v82
    %v85 = vmul.u32 %v78, %v69
    %v86 = vadd.s32 %v81, %v83
    %vm87 = vc.u32 %v81, %v83
    %v88 = vadd.s32 %v84, 1
    %v89 = vsel %vm87, %v88, %v84
    %v90 = vadd.s32 %v85, %v89
    %v91 = vadd.s32 %v90, 536870912
    %v92 = vshrl.u32 %v91, 30
    %v93 = vshll.u32 %v92, 30
    %v94 = vsub.s32 %v90, %v93
    %vm95 = vcmp.lt.s32.totalorder %v94, 0
    %v96 = vsub.s32 0, %v94
    %v97 = vsel %vm95, %v96, %v94
    %v98 = vclz %v97
    %v99 = vsub.s32 %v98, 2
    %vm100 = vcmp.gt.s32.totalorder 0, %v99
    %v101 = vsel %vm100, 0, %v99
    %v102 = vsub.s32 32, %v101
    %v103 = vshll.u32 %v94, %v101
    %v104 = vshrl.u32 %v86, %v102
    %v105 = vor.u32 %v103, %v104
    %v106 = vsub.s32 4294967266, %v101
    %v107 = vadd.s32 %v106, 127
    %v108 = vshll.u32 %v107, 23
    %v109 = vor.u32 4788187, %v108
    %v110 = vand.u32 2147483647, %v109
    %v112 = vcvt.s32.f32 %v105
    %v113 = vmul.f32 %v112, %v110
    %v114 = vxor.u32 %v113, 2147483648
    %v115 = vsel %vm32, %v114, %v113
    %v116 = vsub.s32 4, %v92
    %v117 = vsel %vm32, %v116, %v92
    %v118 = vsel %vm31, %v23, %v115
    %v119 = vsel %vm31, 0, %v117
    %v120 = vcosq.f32.pop %v118
    %v121 = vsinq.f32.pop %v118
    %vm122 = vweird.f32 %v23
    %v123 = vadd.s32 %v119, 3
    %v124 = vand.u32 %v123, 3
    %vm125 = vcmp.lt.s32.totalorder %v124, 2
    %vm126 = vcmp.eq.s32.totalorder %v124, 0
    %v127 = vxor.u32 %v121, 2147483648
    %v128 = vsel %vm126, %v120, %v127
    %vm129 = vcmp.eq.s32.totalorder %v124, 2
    %v130 = vxor.u32 %v120, 2147483648
    %v131 = vsel %vm129, %v130, %v121
    %v132 = vsel %vm125, %v128, %v131
    %v133 = vsel %vm122, nan, %v132
    %v134 = vand.u32 2147483647, %v25
    %vm135 = vcmp.le.f32.partialorder %v134, 0.7853982
    %vm136 = vcmp.lt.s32.totalorder %v25, 0
    %v137 = vand.u32 %v25, 2139095040
    %v138 = vshrl.u32 %v137, 23
    %v139 = vsub.s32 %v138, 127
    %v140 = vand.u32 2147483647, %v25
    %v141 = vand.u32 %v140, 8388607
    %v142 = vor.u32 %v141, 8388608
    %v143 = vsub.s32 0, %v142
    %v144 = vadd.s32 %v139, 1
    %vm145 = vcmp.gt.s32.totalorder %v144, 0
    %v146 = vsel %vm145, %v144, 0
    %v147 = vshrl.u32 %v146, 5
    %v148 = vand.u32 %v146, 31
    %v149 = vsub.s32 32, %v148
    %v150 = vshrl.u32 683565275, %v149
    %v151 = vshll.u32 683565275, %v148
    %v152 = vshrl.u32 2475754826, %v149
    %v153 = vor.u32 %v151, %v152
    %v154 = vshll.u32 2475754826, %v148
    %v155 = vshrl.u32 2131351028, %v149
    %v156 = vor.u32 %v154, %v155
    %v157 = vshll.u32 2131351028, %v148
    %v158 = vshrl.u32 2102212464, %v149
    %v159 = vor.u32 %v157, %v158
    %v160 = vshll.u32 2102212464, %v148
    %v161 = vshrl.u32 920167782, %v149
    %v162 = vor.u32 %v160, %v161
    %v163 = vshll.u32 920167782, %v148
    %v164 = vshrl.u32 1326507024, %v149
    %v165 = vor.u32 %v163, %v164
    %vm166 = vcmp.lt.s32.totalorder %v147, 1
    %vm167 = vcmp.lt.s32.totalorder %v147, 2
    %vm168 = vcmp.lt.s32.totalorder %v147, 3
    %vm169 = vcmp.lt.s32.totalorder %v147, 4
    %v170 = vsel %vm166, %v150, %v153
    %v171 = vsel %vm169, %v159, 2102212464
    %v172 = vsel %vm168, %v156, %v171
    %v173 = vsel %vm167, %v170, %v172
    %v174 = vsel %vm166, %v153, %v156
    %v175 = vsel %vm169, %v162, 920167782
    %v176 = vsel %vm168, %v159, %v175
    %v177 = vsel %vm167, %v174, %v176
    %v178 = vsel %vm166, %v156, %v159
    %v179 = vsel %vm169, %v165, 1326507024
    %v180 = vsel %vm168, %v162, %v179
    %v181 = vsel %vm167, %v178, %v180
    %v182 = vshll.u32 %v142, 8
    %v183 = vmul.u32.u64.compose %v182, %v181
    %v184 = vextract.low.u32 %v183
    %v185 = vextract.high.u32 %v183
    %v186 = vmul.u32.u64.compose %v182, %v177
    %v187 = vextract.low.u32 %v186
    %v188 = vextract.high.u32 %v186
    %v189 = vmul.u32 %v182, %v173
    %v190 = vadd.s32 %v185, %v187
    %vm191 = vc.u32 %v185, %v187
    %v192 = vadd.s32 %v188, 1
    %v193 = vsel %vm191, %v192, %v188
    %v194 = vadd.s32 %v189, %v193
    %v195 = vadd.s32 %v194, 536870912
    %v196 = vshrl.u32 %v195, 30
    %v197 = vshll.u32 %v196, 30
    %v198 = vsub.s32 %v194, %v197
    %vm199 = vcmp.lt.s32.totalorder %v198, 0
    %v200 = vsub.s32 0, %v198
    %v201 = vsel %vm199, %v200, %v198
    %v202 = vclz %v201
    %v203 = vsub.s32 %v202, 2
    %vm204 = vcmp.gt.s32.totalorder 0, %v203
    %v205 = vsel %vm204, 0, %v203
    %v206 = vsub.s32 32, %v205
    %v207 = vshll.u32 %v198, %v205
    %v208 = vshrl.u32 %v190, %v206
    %v209 = vor.u32 %v207, %v208
    %v210 = vsub.s32 4294967266, %v205
    %v211 = vadd.s32 %v210, 127
    %v212 = vshll.u32 %v211, 23
    %v213 = vor.u32 4788187, %v212
    %v214 = vand.u32 2147483647, %v213
    %v216 = vcvt.s32.f32 %v209
    %v217 = vmul.f32 %v216, %v214
    %v218 = vxor.u32 %v217, 2147483648
    %v219 = vsel %vm136, %v218, %v217
    %v220 = vsub.s32 4, %v196
    %v221 = vsel %vm136, %v220, %v196
    %v222 = vsel %vm135, %v25, %v219
    %v223 = vsel %vm135, 0, %v221
    %v224 = vcosq.f32.pop %v222
    %v225 = vsinq.f32.pop %v222
    %vm226 = vweird.f32 %v25
    %v227 = vadd.s32 %v223, 3
    %v228 = vand.u32 %v227, 3
    %vm229 = vcmp.lt.s32.totalorder %v228, 2
    %vm230 = vcmp.eq.s32.totalorder %v228, 0
    %v231 = vxor.u32 %v225, 2147483648
    %v232 = vsel %vm230, %v224, %v231
    %vm233 = vcmp.eq.s32.totalorder %v228, 2
    %v234 = vxor.u32 %v224, 2147483648
    %v235 = vsel %vm233, %v234, %v225
    %v236 = vsel %vm229, %v232, %v235
    %v237 = vsel %vm226, nan, %v236
    %v238 = vsub.f32 %v23, %v25
    %v239 = vand.u32 2147483647, %v238
    %vm240 = vcmp.le.f32.partialorder %v239, 0.7853982
    %vm241 = vcmp.lt.s32.totalorder %v238, 0
    %v242 = vand.u32 %v238, 2139095040
    %v243 = vshrl.u32 %v242, 23
    %v244 = vsub.s32 %v243, 127
    %v245 = vand.u32 2147483647, %v238
    %v246 = vand.u32 %v245, 8388607
    %v247 = vor.u32 %v246, 8388608
    %v248 = vsub.s32 0, %v247
    %v249 = vadd.s32 %v244, 1
    %vm250 = vcmp.gt.s32.totalorder %v249, 0
    %v251 = vsel %vm250, %v249, 0
    %v252 = vshrl.u32 %v251, 5
    %v253 = vand.u32 %v251, 31
    %v254 = vsub.s32 32, %v253
    %v255 = vshrl.u32 683565275, %v254
    %v256 = vshll.u32 683565275, %v253
    %v257 = vshrl.u32 2475754826, %v254
    %v258 = vor.u32 %v256, %v257
    %v259 = vshll.u32 2475754826, %v253
    %v260 = vshrl.u32 2131351028, %v254
    %v261 = vor.u32 %v259, %v260
    %v262 = vshll.u32 2131351028, %v253
    %v263 = vshrl.u32 2102212464, %v254
    %v264 = vor.u32 %v262, %v263
    %v265 = vshll.u32 2102212464, %v253
    %v266 = vshrl.u32 920167782, %v254
    %v267 = vor.u32 %v265, %v266
    %v268 = vshll.u32 920167782, %v253
    %v269 = vshrl.u32 1326507024, %v254
    %v270 = vor.u32 %v268, %v269
    %vm271 = vcmp.lt.s32.totalorder %v252, 1
    %vm272 = vcmp.lt.s32.totalorder %v252, 2
    %vm273 = vcmp.lt.s32.totalorder %v252, 3
    %vm274 = vcmp.lt.s32.totalorder %v252, 4
    %v275 = vsel %vm271, %v255, %v258
    %v276 = vsel %vm274, %v264, 2102212464
    %v277 = vsel %vm273, %v261, %v276
    %v278 = vsel %vm272, %v275, %v277
    %v279 = vsel %vm271, %v258, %v261
    %v280 = vsel %vm274, %v267, 920167782
    %v281 = vsel %vm273, %v264, %v280
    %v282 = vsel %vm272, %v279, %v281
    %v283 = vsel %vm271, %v261, %v264
    %v284 = vsel %vm274, %v270, 1326507024
    %v285 = vsel %vm273, %v267, %v284
    %v286 = vsel %vm272, %v283, %v285
    %v287 = vshll.u32 %v247, 8
    %v288 = vmul.u32.u64.compose %v287, %v286
    %v289 = vextract.low.u32 %v288
    %v290 = vextract.high.u32 %v288
    %v291 = vmul.u32.u64.compose %v287, %v282
    %v292 = vextract.low.u32 %v291
    %v293 = vextract.high.u32 %v291
    %v294 = vmul.u32 %v287, %v278
    %v295 = vadd.s32 %v290, %v292
    %vm296 = vc.u32 %v290, %v292
    %v297 = vadd.s32 %v293, 1
    %v298 = vsel %vm296, %v297, %v293
    %v299 = vadd.s32 %v294, %v298
    %v300 = vadd.s32 %v299, 536870912
    %v301 = vshrl.u32 %v300, 30
    %v302 = vshll.u32 %v301, 30
    %v303 = vsub.s32 %v299, %v302
    %vm304 = vcmp.lt.s32.totalorder %v303, 0
    %v305 = vsub.s32 0, %v303
    %v306 = vsel %vm304, %v305, %v303
    %v307 = vclz %v306
    %v308 = vsub.s32 %v307, 2
    %vm309 = vcmp.gt.s32.totalorder 0, %v308
    %v310 = vsel %vm309, 0, %v308
    %v311 = vsub.s32 32, %v310
    %v312 = vshll.u32 %v303, %v310
    %v313 = vshrl.u32 %v295, %v311
    %v314 = vor.u32 %v312, %v313
    %v315 = vsub.s32 4294967266, %v310
    %v316 = vadd.s32 %v315, 127
    %v317 = vshll.u32 %v316, 23
    %v318 = vor.u32 4788187, %v317
    %v319 = vand.u32 2147483647, %v318
    %v321 = vcvt.s32.f32 %v314
    %v322 = vmul.f32 %v321, %v319
    %v323 = vxor.u32 %v322, 2147483648
    %v324 = vsel %vm241, %v323, %v322
    %v325 = vsub.s32 4, %v301
    %v326 = vsel %vm241, %v325, %v301
    %v327 = vsel %vm240, %v238, %v324
    %v328 = vsel %vm240, 0, %v326
    %v329 = vcosq.f32.pop %v327
    %v330 = vsinq.f32.pop %v327
    %vm331 = vweird.f32 %v238
    %v332 = vand.u32 %v328, 3
    %vm333 = vcmp.lt.s32.totalorder %v332, 2
    %vm334 = vcmp.eq.s32.totalorder %v332, 0
    %v335 = vxor.u32 %v330, 2147483648
    %v336 = vsel %vm334, %v329, %v335
    %vm337 = vcmp.eq.s32.totalorder %v332, 2
    %v338 = vxor.u32 %v329, 2147483648
    %v339 = vsel %vm337, %v338, %v330
    %v340 = vsel %vm333, %v336, %v339
    %v341 = vsel %vm331, nan, %v340
    %v342 = vand.u32 2147483647, %v238
    %vm343 = vcmp.le.f32.partialorder %v342, 0.7853982
    %vm344 = vcmp.lt.s32.totalorder %v238, 0
    %v345 = vand.u32 %v238, 2139095040
    %v346 = vshrl.u32 %v345, 23
    %v347 = vsub.s32 %v346, 127
    %v348 = vand.u32 2147483647, %v238
    %v349 = vand.u32 %v348, 8388607
    %v350 = vor.u32 %v349, 8388608
    %v351 = vsub.s32 0, %v350
    %v352 = vadd.s32 %v347, 1
    %vm353 = vcmp.gt.s32.totalorder %v352, 0
    %v354 = vsel %vm353, %v352, 0
    %v355 = vshrl.u32 %v354, 5
    %v356 = vand.u32 %v354, 31
    %v357 = vsub.s32 32, %v356
    %v358 = vshrl.u32 683565275, %v357
    %v359 = vshll.u32 683565275, %v356
    %v360 = vshrl.u32 2475754826, %v357
    %v361 = vor.u32 %v359, %v360
    %v362 = vshll.u32 2475754826, %v356
    %v363 = vshrl.u32 2131351028, %v357
    %v364 = vor.u32 %v362, %v363
    %v365 = vshll.u32 2131351028, %v356
    %v366 = vshrl.u32 2102212464, %v357
    %v367 = vor.u32 %v365, %v366
    %v368 = vshll.u32 2102212464, %v356
    %v369 = vshrl.u32 920167782, %v357
    %v370 = vor.u32 %v368, %v369
    %v371 = vshll.u32 920167782, %v356
    %v372 = vshrl.u32 1326507024, %v357
    %v373 = vor.u32 %v371, %v372
    %vm374 = vcmp.lt.s32.totalorder %v355, 1
    %vm375 = vcmp.lt.s32.totalorder %v355, 2
    %vm376 = vcmp.lt.s32.totalorder %v355, 3
    %vm377 = vcmp.lt.s32.totalorder %v355, 4
    %v378 = vsel %vm374, %v358, %v361
    %v379 = vsel %vm377, %v367, 2102212464
    %v380 = vsel %vm376, %v364, %v379
    %v381 = vsel %vm375, %v378, %v380
    %v382 = vsel %vm374, %v361, %v364
    %v383 = vsel %vm377, %v370, 920167782
    %v384 = vsel %vm376, %v367, %v383
    %v385 = vsel %vm375, %v382, %v384
    %v386 = vsel %vm374, %v364, %v367
    %v387 = vsel %vm377, %v373, 1326507024
    %v388 = vsel %vm376, %v370, %v387
    %v389 = vsel %vm375, %v386, %v388
    %v390 = vshll.u32 %v350, 8
    %v391 = vmul.u32.u64.compose %v390, %v389
    %v392 = vextract.low.u32 %v391
    %v393 = vextract.high.u32 %v391
    %v394 = vmul.u32.u64.compose %v390, %v385
    %v395 = vextract.low.u32 %v394
    %v396 = vextract.high.u32 %v394
    %v397 = vmul.u32 %v390, %v381
    %v398 = vadd.s32 %v393, %v395
    %vm399 = vc.u32 %v393, %v395
    %v400 = vadd.s32 %v396, 1
    %v401 = vsel %vm399, %v400, %v396
    %v402 = vadd.s32 %v397, %v401
    %v403 = vadd.s32 %v402, 536870912
    %v404 = vshrl.u32 %v403, 30
    %v405 = vshll.u32 %v404, 30
    %v406 = vsub.s32 %v402, %v405
    %vm407 = vcmp.lt.s32.totalorder %v406, 0
    %v408 = vsub.s32 0, %v406
    %v409 = vsel %vm407, %v408, %v406
    %v410 = vclz %v409
    %v411 = vsub.s32 %v410, 2
    %vm412 = vcmp.gt.s32.totalorder 0, %v411
    %v413 = vsel %vm412, 0, %v411
    %v414 = vsub.s32 32, %v413
    %v415 = vshll.u32 %v406, %v413
    %v416 = vshrl.u32 %v398, %v414
    %v417 = vor.u32 %v415, %v416
    %v418 = vsub.s32 4294967266, %v413
    %v419 = vadd.s32 %v418, 127
    %v420 = vshll.u32 %v419, 23
    %v421 = vor.u32 4788187, %v420
    %v422 = vand.u32 2147483647, %v421
    %v424 = vcvt.s32.f32 %v417
    %v425 = vmul.f32 %v424, %v422
    %v426 = vxor.u32 %v425, 2147483648
    %v427 = vsel %vm344, %v426, %v425
    %v428 = vsub.s32 4, %v404
    %v429 = vsel %vm344, %v428, %v404
    %v430 = vsel %vm343, %v238, %v427
    %v431 = vsel %vm343, 0, %v429
    %v432 = vcosq.f32.pop %v430
    %v433 = vsinq.f32.pop %v430
    %vm434 = vweird.f32 %v238
    %v435 = vadd.s32 %v431, 3
    %v436 = vand.u32 %v435, 3
    %vm437 = vcmp.lt.s32.totalorder %v436, 2
    %vm438 = vcmp.eq.s32.totalorder %v436, 0
    %v439 = vxor.u32 %v433, 2147483648
    %v440 = vsel %vm438, %v432, %v439
    %vm441 = vcmp.eq.s32.totalorder %v436, 2
    %v442 = vxor.u32 %v432, 2147483648
    %v443 = vsel %vm441, %v442, %v433
    %v444 = vsel %vm437, %v440, %v443
    %v445 = vsel %vm434, nan, %v444
    %v446 = vmul.f32 %v445, %v27
    %v447 = vmul.f32 %v446, %v29
    %v448 = vsub.f32 0.0, %v447
    %v449 = vmul.f32 %v133, 19.6
    %v450 = vsub.f32 %v448, %v449
    %v451 = vmul.f32 %v237, 9.8
    %v452 = vsub.f32 %v447, %v451
    %v453 = vsub.f32 %v29, %v27
    %v454 = vmul.f32 %v445, %v29
    %v455 = vmul.f32 %v454, %v453
    %v456 = vsub.f32 %v450, %v455
    %v457 = vmul.f32 %v446, %v453
    %v458 = vsub.f32 %v452, %v457
    %v459 = vmul.f32 %v341, %v341
    %v460 = vsub.f32 2.0, %v459
    %v461 = vrcp.pop %v460
    %v462 = vmul.f32 %v460, %v461
    %v463 = vsub.f32 2.0, %v462
    %v464 = vmul.f32 %v461, %v463
    %v465 = vmul.f32 %v341, %v458
    %v466 = vsub.f32 %v456, %v465
    %v467 = vmul.f32 %v466, %v464
    %468 = vst [vmem:[#allocation5] sm:$0xff] %v467
    %v469 = vmul.f32 %v458, 2.0
    %v470 = vmul.f32 %v341, %v456
    %v471 = vsub.f32 %v469, %v470
    %v472 = vmul.f32 %v471, %v464
    %s473 = scalar_lea.vmem [#allocation5], 8
    %474 = vst [vmem:[%s473] sm:$0xff] %v472
    // Predicated region
    $region10: #{tpu_custom_call.1} parent=1 // pred_check
      _
    $region11: #{tpu_custom_call.1} parent=1 // pred_check_branch
      %476 = sbr.rel (0) target = $region13
    $region12: #{tpu_custom_call.1} parent=1 // pred_region
      %s478 = ssub.s32 256, 256
      %479 = vsyncadd [#allocation4], %s478
      %s480 = sshll.u32 [#allocation5], 4
      %s481 = int_to_ptr.vmem [resolvable:$true] %s480
      %486 = dma.vmem_to_hbm [thread:$0]  %s481, 256, %s1, [#allocation4], 128, 128, 8
    $region13: #{tpu_custom_call.1} parent=1 // pred_fallthru
      _
    // Predicated region
    $region14: #{tpu_custom_call.1} parent=1 // pred_check
      _
    $region15: #{tpu_custom_call.1} parent=1 // pred_check_branch
      %488 = sbr.rel (0) target = $region17
    $region16: #{tpu_custom_call.1} parent=1 // pred_region
      %489 = dma.done [#allocation4], 256
    $region17: #{tpu_custom_call.1} parent=1 // pred_fallthru
      _
    %490 = vsyncpa [#allocation3], 1
    %491 = vsyncpa [#allocation4], 1

</llo_original>
